<compile_context>
chip_gen: v6e
topology: v6e:2x2x1
jax: 0.10.0
libtpu: 0.0.40
codegen_flags: <defaults>
</compile_context>

<pallas_src>
import numpy as np
import jax
import jax.numpy as jnp
from jax.experimental import pallas as pl
from jax.experimental.pallas import tpu as pltpu


def _postprocess_kernel(x_ref, o_ref):
    # x_ref / o_ref: (TILE_N, LANE_TILE) VMEM tiles.
    x = x_ref[...]
    x = jnp.maximum(x, jnp.asarray(1e-10, x.dtype))   # NaN propagates like torch
    o_ref[...] = jnp.log(x)


def _round_up(x, m):
    return ((x + m - 1) // m) * m


def post_process_spectrograms(x, sample_rate, max_frequency):
    """JAX/Pallas equivalent of PostProcessSpectrograms.forward."""
    *lead, F, T = x.shape

    # Static frequency mask (prefix) — matches np.linspace semantics exactly.
    frequencies = np.linspace(0.0, sample_rate / 2.0, F)
    K = int(np.sum(frequencies <= max_frequency))
    assert K > 0, "max_frequency excludes every frequency bin"

    N = int(np.prod(lead)) if lead else 1
    FT = F * T
    KT = K * T

    # Lane-dense 2-D view: each row is one (F, T) slab flattened row-major,
    # so the kept frequencies are exactly the first K*T entries of each row.
    # reshape of a contiguous array is free.
    x2 = x.reshape(N, FT)

    itemsize = np.dtype(x.dtype).itemsize
    sublane = {4: 8, 2: 16, 1: 32}.get(itemsize, 8)

    # ---- tile selection -------------------------------------------------
    # Lane tile: multiple of 128 covering the kept prefix in few blocks.
    LANE_TILE = min(_round_up(KT, 128), 4096)
    lane_blocks = pl.cdiv(KT, LANE_TILE)

    # Row tile: batch enough slabs per grid step that one tile is ~2 MiB, so
    # the kernel is HBM-bandwidth bound rather than per-step-overhead bound,
    # while (in + out) x 2 double-buffers stays well inside v7x's VMEM.
    target_tile_bytes = 2 * 1024 * 1024
    rows_per_tile = max(1, target_tile_bytes // (LANE_TILE * itemsize))
    if N <= sublane:
        TILE_N = N                       # full (small) leading dim is legal
    else:
        TILE_N = max(sublane, _round_up(min(rows_per_tile, N), sublane))
        # Keep enough grid steps to shard across TensorCores when possible.
        while TILE_N > sublane and pl.cdiv(N, TILE_N) * lane_blocks < 8:
            TILE_N = max(sublane, _round_up(TILE_N // 2, sublane))
    n_blocks = pl.cdiv(N, TILE_N)

    out = pl.pallas_call(
        _postprocess_kernel,
        out_shape=jax.ShapeDtypeStruct((N, KT), x.dtype),
        grid=(n_blocks, lane_blocks),
        in_specs=[pl.BlockSpec((TILE_N, LANE_TILE), lambda i, j: (i, j))],
        out_specs=pl.BlockSpec((TILE_N, LANE_TILE), lambda i, j: (i, j)),
        compiler_params=pltpu.CompilerParams(
            dimension_semantics=("parallel", "parallel"),
            # ~2 MiB tiles double-buffered (in + out) fit comfortably; set the
            # limit explicitly so v5e (16 MiB default) / v7x behave the same.
            vmem_limit_bytes=32 * 1024 * 1024,
        ),
    )(x2)

    return out.reshape(*lead, K, T)


if __name__ == "__main__":
    # Small shapes consistent with a spectrogram batch: (B, C, F, T).
    B, C, F, T = 2, 4, 16, 16
    sample_rate = 16000
    max_frequency = 4000  # keeps the first 8 of 16 frequency bins

    key = jax.random.PRNGKey(0)
    # Positive spectrogram-like magnitudes; force a few entries below 1e-10
    # to exercise the clamp path.
    x = jax.random.uniform(key, (B, C, F, T), dtype=jnp.float32, minval=0.0, maxval=2.0)
    x = x.at[0, 0, 0, :4].set(1e-12)

    y = post_process_spectrograms(x, sample_rate, max_frequency)
    y = jax.block_until_ready(y)

    # Reference (pure numpy) check of the exact PyTorch semantics.
    freqs = np.linspace(0.0, sample_rate / 2.0, F)
    mask = freqs <= max_frequency
    x_np = np.asarray(x)
    ref = np.log(np.where(x_np < 1e-10, 1e-10, x_np))[..., mask, :]

    assert y.shape == ref.shape, (y.shape, ref.shape)
    np.testing.assert_allclose(np.asarray(y), ref, rtol=1e-6, atol=1e-6)

    print("KERNEL_OK")
</pallas_src>

<mosaic_0001>
module attributes {stable_mosaic.version = 11 : i64} {
  func.func @_postprocess_kernel(%arg0: i32, %arg1: i32, %arg2: memref<8x128xf32, #tpu.memory_space<vmem>>, %arg3: memref<8x128xf32, #tpu.memory_space<vmem>>) attributes {dimension_semantics = [#tpu.dimension_semantics<parallel>, #tpu.dimension_semantics<parallel>], iteration_bounds = array<i64: 1, 1>, scalar_prefetch = 0 : i64, scratch_operands = 0 : i64, tpu.core_type = #tpu.core_type<tc>, window_params = [{transform_indices = @transform_0, window_bounds = array<i64: 8, 128>}, {transform_indices = @transform_1, window_bounds = array<i64: 8, 128>}]} {
    %c0 = arith.constant 0 : index
    %c0_0 = arith.constant 0 : index
    %0 = vector.load %arg2[%c0, %c0_0] : memref<8x128xf32, #tpu.memory_space<vmem>>, vector<8x128xf32>
    %cst = arith.constant 1.000000e-10 : f32
    %1 = vector.broadcast %cst : f32 to vector<8x128xf32>
    %2 = arith.maximumf %0, %1 : vector<8x128xf32>
    %3 = math.log %2 : vector<8x128xf32>
    %c0_1 = arith.constant 0 : index
    %c0_2 = arith.constant 0 : index
    %4 = vector.load %arg3[%c0_1, %c0_2] : memref<8x128xf32, #tpu.memory_space<vmem>>, vector<8x128xf32>
    tpu.vector_store %arg3[%c0_1, %c0_2], %3 {strides = array<i32>} : memref<8x128xf32, #tpu.memory_space<vmem>>, vector<8x128xf32>,
    return
  }
  func.func @transform_0(%arg0: i32, %arg1: i32) -> (i32, i32) {
    %c0_i32 = arith.constant 0 : i32
    return %arg0, %arg1 : i32, i32
  }
  func.func @transform_1(%arg0: i32, %arg1: i32) -> (i32, i32) {
    %c0_i32 = arith.constant 0 : i32
    return %arg0, %arg1 : i32, i32
  }
}

</mosaic_0001>

<llo_original>
// kernel: tpu_custom_call.1
$region0: #{tpu_custom_call.1}
  #allocation0 [shape = 'u32[]', space=smem, size = 0x4, offset = 0x4, fixed_abs, tag = 'smem constant byte address 0x4 - core index']
  #allocation1 [shape = 'u32[144,128]{1,0:T(1,128)}', space=vmem, size = 0x12000, scoped, tag = 'internal scratch']
  %s0 = inlined_call_operand.hbm [shape: f32[8,256], index: 0, kind: input, shape index: {}]
  %s1 = inlined_call_operand.hbm [shape: f32[8,128], index: 1, kind: output, shape index: {}]
  %s2 = sld [smem:[#allocation0]]
  $region18: #{tpu_custom_call.1} parent=0
    _
  %s4 = ssub.s32 1, %s2
  %s5 = scalar_select 0, %s4, %s2
  $region1: #{tpu_custom_call.1} parent=0
    #allocation2 [shape = 'u8[4096]{0}', space=vmem, size = 0x1000, scoped, tag = 'input window, operand 0, single buffered']
    #allocation3 [shape = 's32[1]{0}', space=sflag, size = 0x4, scoped, tag = 'scoped memory for tpu_custom_call.1']
    #allocation4 [shape = 's32[1]{0}', space=sflag, size = 0x4, scoped, tag = 'scoped memory for tpu_custom_call.1']
    #allocation5 [shape = 'u8[4096]{0}', space=vmem, size = 0x1000, scoped, tag = 'output window, operand 0, single buffered']
    %6 = vsyncpa [#allocation3], 0
    %7 = vsyncpa [#allocation4], 0
    // Predicated region
    $region2: #{tpu_custom_call.1} parent=1 // pred_check
      _
    $region3: #{tpu_custom_call.1} parent=1 // pred_check_branch
      %9 = sbr.rel (0) target = $region5
    $region4: #{tpu_custom_call.1} parent=1 // pred_region
      %s11 = ssub.s32 128, 128
      %12 = vsyncadd [#allocation3], %s11
      %s14 = sshll.u32 [#allocation2], 4
      %s15 = int_to_ptr.vmem [resolvable:$true] %s14
      %17 = dma.hbm_to_vmem [thread:$0]  %s0, 128, %s15, [#allocation3]
    $region5: #{tpu_custom_call.1} parent=1 // pred_fallthru
      _
    // Predicated region
    $region6: #{tpu_custom_call.1} parent=1 // pred_check
      _
    $region7: #{tpu_custom_call.1} parent=1 // pred_check_branch
      %19 = sbr.rel (0) target = $region9
    $region8: #{tpu_custom_call.1} parent=1 // pred_region
      %20 = dma.done [#allocation3], 128
    $region9: #{tpu_custom_call.1} parent=1 // pred_fallthru
      _
    %v21 = vld [vmem:[#allocation2] sm:$0xff]
    %v22 = vmax.f32 %v21, 1e-10
    %v23 = vlog2.pop %v22
    %v24 = vmul.f32 %v23, 0.6931472
    %25 = vst [vmem:[#allocation5] sm:$0xff] %v24
    // Predicated region
    $region10: #{tpu_custom_call.1} parent=1 // pred_check
      _
    $region11: #{tpu_custom_call.1} parent=1 // pred_check_branch
      %27 = sbr.rel (0) target = $region13
    $region12: #{tpu_custom_call.1} parent=1 // pred_region
      %s29 = ssub.s32 128, 128
      %30 = vsyncadd [#allocation4], %s29
      %s32 = sshll.u32 [#allocation5], 4
      %s33 = int_to_ptr.vmem [resolvable:$true] %s32
      %35 = dma.vmem_to_hbm [thread:$0]  %s33, 128, %s1, [#allocation4]
    $region13: #{tpu_custom_call.1} parent=1 // pred_fallthru
      _
    // Predicated region
    $region14: #{tpu_custom_call.1} parent=1 // pred_check
      _
    $region15: #{tpu_custom_call.1} parent=1 // pred_check_branch
      %37 = sbr.rel (0) target = $region17
    $region16: #{tpu_custom_call.1} parent=1 // pred_region
      %38 = dma.done [#allocation4], 128
    $region17: #{tpu_custom_call.1} parent=1 // pred_fallthru
      _
    %39 = vsyncpa [#allocation3], 1
    %40 = vsyncpa [#allocation4], 1

</llo_original>
